<compile_context>
chip_gen: v7x
topology: tpu7x:2x2x1
jax: 0.10.0
libtpu: 0.0.40
codegen_flags: <defaults>
</compile_context>

<pallas_src>
import functools
import math

import jax
import jax.numpy as jnp
from jax.experimental import pallas as pl
from jax.experimental.pallas import tpu as pltpu


def _fused_ca_to_timestep_kernel(
    t_ref,      # [B, 1]            f32   augmentation timestep
    w1_ref,     # [F, D]            bf16
    b1_ref,     # [1, D]            f32
    w2_ref,     # [D, D]            bf16
    b2_ref,     # [1, D]            f32
    te_ref,     # [B, D]            te.dtype  (aliased with out_ref)
    out_ref,    # [B, D]            te.dtype
    *,
    num_features: int,
    max_period: float,
):
    B = t_ref.shape[0]
    half = num_features // 2

    # ---- sinusoidal timestep embedding, fused (matches torch reference:
    #      freqs = exp(-log(max_period) * arange(half)/half), emb = [cos|sin]).
    lane = jax.lax.broadcasted_iota(jnp.int32, (B, num_features), 1)
    j = jnp.where(lane < half, lane, lane - half).astype(jnp.float32)
    freqs = jnp.exp(j * (-math.log(max_period) / half))          # [B, F]  (EUP)
    args = t_ref[...] * freqs                                    # [B,1]*[B,F] -> [B,F]
    emb = jnp.where(lane < half, jnp.cos(args), jnp.sin(args))   # [B, F] f32

    # ---- h = SiLU(emb @ W1 + b1): bf16 operands into the MXU, f32 accumulate,
    #      all elementwise math in f32.
    h = jnp.dot(emb.astype(w1_ref.dtype), w1_ref[...],
                preferred_element_type=jnp.float32)
    h = h + b1_ref[...].astype(jnp.float32)
    h = h * jax.nn.sigmoid(h)                                    # SiLU (f32, EUP)

    # ---- proj = h @ W2 + b2
    proj = jnp.dot(h.astype(w2_ref.dtype), w2_ref[...],
                   preferred_element_type=jnp.float32)
    proj = proj + b2_ref[...].astype(jnp.float32)

    # ---- residual add onto the (aliased) timestep embedding buffer.
    out_ref[...] = (te_ref[...].astype(jnp.float32) + proj).astype(out_ref.dtype)


def gaussian_conditioning_augmentation_to_timestep(
    context: dict,
    params: dict,
    num_features: int,
    max_period: float = 10000.0,
) -> dict:
    """Functional equivalent of the PyTorch module's forward()."""
    aug_t = context["augmentation_timestep"]            # [B]
    te = context["timestep_embedding"]                  # [B, D]
    assert num_features % 2 == 0, "odd num_features not supported (zero-pad branch)"
    B = aug_t.shape[0]
    D = te.shape[-1]

    t2d = aug_t.astype(jnp.float32).reshape(B, 1)
    w1 = params["w1"]                                    # [F, D] bf16
    b1 = params["b1"].reshape(1, D).astype(jnp.float32)  # [1, D]
    w2 = params["w2"]                                    # [D, D] bf16
    b2 = params["b2"].reshape(1, D).astype(jnp.float32)  # [1, D]

    kernel = functools.partial(
        _fused_ca_to_timestep_kernel,
        num_features=num_features,
        max_period=max_period,
    )

    vmem_spec = lambda: pl.BlockSpec(memory_space=pltpu.MemorySpace.VMEM)

    out = pl.pallas_call(
        kernel,
        out_shape=jax.ShapeDtypeStruct((B, D), te.dtype),
        in_specs=[vmem_spec() for _ in range(6)],
        out_specs=vmem_spec(),
        # te (input index 5) aliases the output -> in-place residual add.
        input_output_aliases={5: 0},
    )(t2d, w1, b1, w2, b2, te)

    new_context = dict(context)
    new_context["timestep_embedding"] = out
    return new_context


# ----------------------------------------------------------------------------
# Pure-JAX reference (same bf16 weight quantization as the kernel).
# ----------------------------------------------------------------------------
def _timestep_embedding_ref(timesteps, dim, max_period=10000.0):
    half = dim // 2
    freqs = jnp.exp(
        -math.log(max_period) * jnp.arange(half, dtype=jnp.float32) / half
    )
    args = timesteps.astype(jnp.float32)[:, None] * freqs[None, :]
    return jnp.concatenate([jnp.cos(args), jnp.sin(args)], axis=-1)


def _reference(context, params, num_features, max_period=10000.0):
    emb = _timestep_embedding_ref(
        context["augmentation_timestep"], num_features, max_period
    )
    w1 = params["w1"].astype(jnp.float32)
    w2 = params["w2"].astype(jnp.float32)
    h = emb.astype(jnp.bfloat16).astype(jnp.float32) @ w1 + params["b1"]
    h = h * jax.nn.sigmoid(h)
    proj = h.astype(jnp.bfloat16).astype(jnp.float32) @ w2 + params["b2"]
    return context["timestep_embedding"] + proj


if __name__ == "__main__":
    num_features = 32
    time_embedding_mult = 4
    D = num_features * time_embedding_mult  # 128
    B = 2

    key = jax.random.PRNGKey(0)
    k1, k2, k3, k4, k5, k6 = jax.random.split(key, 6)

    # Linear weights stored as [in, out]; weights streamed in bf16.
    params = {
        "w1": (jax.random.normal(k1, (num_features, D), jnp.float32) * 0.02
               ).astype(jnp.bfloat16),
        "b1": jax.random.normal(k2, (D,), jnp.float32) * 0.01,
        "w2": (jax.random.normal(k3, (D, D), jnp.float32) * 0.02
               ).astype(jnp.bfloat16),
        "b2": jax.random.normal(k4, (D,), jnp.float32) * 0.01,
    }

    context = {
        "timestep_embedding": jax.random.normal(k5, (B, D), jnp.float32),
        "augmentation_timestep": jax.random.uniform(
            k6, (B,), jnp.float32, minval=0.0, maxval=1000.0
        ),
    }

    out_ctx = gaussian_conditioning_augmentation_to_timestep(
        context, params, num_features
    )
    result = jax.block_until_ready(out_ctx["timestep_embedding"])

    ref = _reference(context, params, num_features)
    assert result.shape == (B, D)
    assert jnp.allclose(result, ref, atol=2e-3, rtol=2e-3), (
        float(jnp.max(jnp.abs(result - ref)))
    )

    print("KERNEL_OK")
</pallas_src>

<mosaic_0001>
module attributes {stable_mosaic.version = 11 : i64} {
  func.func @_fused_ca_to_timestep_kernel(%arg0: memref<2x1xf32, #tpu.memory_space<vmem>>, %arg1: memref<32x128xbf16, #tpu.memory_space<vmem>>, %arg2: memref<1x128xf32, #tpu.memory_space<vmem>>, %arg3: memref<128x128xbf16, #tpu.memory_space<vmem>>, %arg4: memref<1x128xf32, #tpu.memory_space<vmem>>, %arg5: memref<2x128xf32, #tpu.memory_space<vmem>>, %arg6: memref<2x128xf32, #tpu.memory_space<vmem>>) attributes {dimension_semantics = [], scalar_prefetch = 0 : i64, scratch_operands = 0 : i64, tpu.core_type = #tpu.core_type<tc>} {
    %0 = tpu.iota {dimensions = array<i32: 1>} : vector<2x32xi32>
    %c16_i32 = arith.constant 16 : i32
    %1 = vector.broadcast %c16_i32 : i32 to vector<2x32xi32>
    %2 = arith.cmpi slt, %0, %1 : vector<2x32xi32>
    %c16_i32_0 = arith.constant 16 : i32
    %3 = vector.broadcast %c16_i32_0 : i32 to vector<2x32xi32>
    %4 = arith.subi %0, %3 : vector<2x32xi32>
    %5 = arith.select %2, %0, %4 : vector<2x32xi1>, vector<2x32xi32>
    %6 = arith.sitofp %5 : vector<2x32xi32> to vector<2x32xf32>
    %cst = arith.constant -0.575646281 : f32
    %7 = vector.broadcast %cst : f32 to vector<2x32xf32>
    %8 = arith.mulf %6, %7 : vector<2x32xf32>
    %9 = math.exp %8 : vector<2x32xf32>
    %c0 = arith.constant 0 : index
    %c0_1 = arith.constant 0 : index
    %10 = vector.load %arg0[%c0, %c0_1] : memref<2x1xf32, #tpu.memory_space<vmem>>, vector<2x1xf32>
    %11 = vector.broadcast %10 : vector<2x1xf32> to vector<2x32xf32>
    %12 = arith.mulf %11, %9 : vector<2x32xf32>
    %c16_i32_2 = arith.constant 16 : i32
    %13 = vector.broadcast %c16_i32_2 : i32 to vector<2x32xi32>
    %14 = arith.cmpi slt, %0, %13 : vector<2x32xi32>
    %15 = math.cos %12 : vector<2x32xf32>
    %16 = math.sin %12 : vector<2x32xf32>
    %17 = arith.select %14, %15, %16 : vector<2x32xi1>, vector<2x32xf32>
    %18 = arith.truncf %17 : vector<2x32xf32> to vector<2x32xbf16>
    %c0_3 = arith.constant 0 : index
    %c0_4 = arith.constant 0 : index
    %19 = vector.load %arg1[%c0_3, %c0_4] : memref<32x128xbf16, #tpu.memory_space<vmem>>, vector<32x128xbf16>
    %cst_5 = arith.constant dense<0.000000e+00> : vector<2x128xf32>
    %20 = tpu.matmul %18, %19, %cst_5 {dimension_numbers = #tpu.dot_dimension_numbers<[1], [0], [0], [1], [0, 0, 1, 1], [], []>} : vector<2x32xbf16>, vector<32x128xbf16>, vector<2x128xf32> -> vector<2x128xf32>
    %c0_6 = arith.constant 0 : index
    %c0_7 = arith.constant 0 : index
    %21 = vector.load %arg2[%c0_6, %c0_7] : memref<1x128xf32, #tpu.memory_space<vmem>>, vector<1x128xf32>
    %22 = vector.broadcast %21 : vector<1x128xf32> to vector<2x128xf32>
    %23 = arith.addf %20, %22 : vector<2x128xf32>
    %24 = arith.negf %23 : vector<2x128xf32>
    %25 = math.exp %24 : vector<2x128xf32>
    %cst_8 = arith.constant 1.000000e+00 : f32
    %26 = vector.broadcast %cst_8 : f32 to vector<2x128xf32>
    %27 = arith.addf %26, %25 : vector<2x128xf32>
    %28 = arith.divf %26, %27 : vector<2x128xf32>
    %29 = arith.mulf %23, %28 : vector<2x128xf32>
    %30 = arith.truncf %29 : vector<2x128xf32> to vector<2x128xbf16>
    %c0_9 = arith.constant 0 : index
    %c0_10 = arith.constant 0 : index
    %31 = vector.load %arg3[%c0_9, %c0_10] : memref<128x128xbf16, #tpu.memory_space<vmem>>, vector<128x128xbf16>
    %cst_11 = arith.constant dense<0.000000e+00> : vector<2x128xf32>
    %32 = tpu.matmul %30, %31, %cst_11 {dimension_numbers = #tpu.dot_dimension_numbers<[1], [0], [0], [1], [0, 0, 1, 1], [], []>} : vector<2x128xbf16>, vector<128x128xbf16>, vector<2x128xf32> -> vector<2x128xf32>
    %c0_12 = arith.constant 0 : index
    %c0_13 = arith.constant 0 : index
    %33 = vector.load %arg4[%c0_12, %c0_13] : memref<1x128xf32, #tpu.memory_space<vmem>>, vector<1x128xf32>
    %34 = vector.broadcast %33 : vector<1x128xf32> to vector<2x128xf32>
    %35 = arith.addf %32, %34 : vector<2x128xf32>
    %c0_14 = arith.constant 0 : index
    %c0_15 = arith.constant 0 : index
    %36 = vector.load %arg5[%c0_14, %c0_15] : memref<2x128xf32, #tpu.memory_space<vmem>>, vector<2x128xf32>
    %37 = arith.addf %36, %35 : vector<2x128xf32>
    %c0_16 = arith.constant 0 : index
    %c0_17 = arith.constant 0 : index
    %38 = vector.load %arg6[%c0_16, %c0_17] : memref<2x128xf32, #tpu.memory_space<vmem>>, vector<2x128xf32>
    tpu.vector_store %arg6[%c0_16, %c0_17], %37 {strides = array<i32>} : memref<2x128xf32, #tpu.memory_space<vmem>>, vector<2x128xf32>,
    return
  }
}

</mosaic_0001>

<llo_original>
// kernel: tpu_custom_call.1
$region0: #{tpu_custom_call.1}
  #allocation0 [shape = 'u32[]', space=smem, size = 0x4, offset = 0x4, fixed_abs, tag = 'smem constant byte address 0x4 - core index']
  #allocation1 [shape = 'u32[144,128]{1,0:T(1,128)}', space=vmem, size = 0x12000, scoped, tag = 'internal scratch']
  %s0 = inlined_call_operand.vmem [shape: f32[2,1], index: 0, kind: input, shape index: {}]
  %s1 = inlined_call_operand.vmem [shape: bf16[32,128], index: 1, kind: input, shape index: {}]
  %s2 = inlined_call_operand.vmem [shape: f32[1,128], index: 2, kind: input, shape index: {}]
  %s3 = inlined_call_operand.hbm [shape: bf16[128,128], index: 3, kind: input, shape index: {}]
  %s4 = inlined_call_operand.vmem [shape: f32[1,128], index: 4, kind: input, shape index: {}]
  %s5 = inlined_call_operand.hbm [shape: f32[2,128], index: 5, kind: input, shape index: {}, may-alias: {5,6}]
  %s6 = inlined_call_operand.hbm [shape: f32[2,128], index: 6, kind: output, shape index: {}, may-alias: {5,6}]
  %s7 = sld [smem:[#allocation0]]
  $region42: #{tpu_custom_call.1} parent=0
    _
  %s9 = ssub.s32 1, %s7
  %s10 = scalar_select 0, %s9, %s7
  $region1: #{tpu_custom_call.1} parent=0
    #allocation2 [shape = 'u8[32768]{0}', space=vmem, size = 0x8000, scoped, tag = 'input window, operand 3, single buffered']
    #allocation3 [shape = 's32[1]{0}', space=sflag, size = 0x4, scoped, tag = 'scoped memory for tpu_custom_call.1']
    #allocation4 [shape = 's32[1]{0}', space=sflag, size = 0x4, scoped, tag = 'scoped memory for tpu_custom_call.1']
    #allocation5 [shape = 'u8[1024]{0}', space=vmem, size = 0x400, scoped, tag = 'input window, operand 5, single buffered']
    #allocation6 [shape = 's32[1]{0}', space=sflag, size = 0x4, scoped, tag = 'scoped memory for tpu_custom_call.1']
    #allocation7 [shape = 'u8[1024]{0}', space=vmem, size = 0x400, scoped, tag = 'output window, operand 0, single buffered']
    %11 = vsyncpa [#allocation3], 0
    %12 = vsyncpa [#allocation6], 0
    %13 = vsyncpa [#allocation4], 0
    // Predicated region
    $region2: #{tpu_custom_call.1} parent=1 // pred_check
      _
    $region3: #{tpu_custom_call.1} parent=1 // pred_check_branch
      %15 = sbr.rel (0) target = $region5
    $region4: #{tpu_custom_call.1} parent=1 // pred_region
      _
    $region5: #{tpu_custom_call.1} parent=1 // pred_fallthru
      _
    // Predicated region
    $region6: #{tpu_custom_call.1} parent=1 // pred_check
      _
    $region7: #{tpu_custom_call.1} parent=1 // pred_check_branch
      %17 = sbr.rel (0) target = $region9
    $region8: #{tpu_custom_call.1} parent=1 // pred_region
      _
    $region9: #{tpu_custom_call.1} parent=1 // pred_fallthru
      _
    // Predicated region
    $region10: #{tpu_custom_call.1} parent=1 // pred_check
      _
    $region11: #{tpu_custom_call.1} parent=1 // pred_check_branch
      %19 = sbr.rel (0) target = $region13
    $region12: #{tpu_custom_call.1} parent=1 // pred_region
      _
    $region13: #{tpu_custom_call.1} parent=1 // pred_fallthru
      _
    // Predicated region
    $region14: #{tpu_custom_call.1} parent=1 // pred_check
      _
    $region15: #{tpu_custom_call.1} parent=1 // pred_check_branch
      %21 = sbr.rel (0) target = $region17
    $region16: #{tpu_custom_call.1} parent=1 // pred_region
      %s23 = ssub.s32 1024, 1024
      %24 = vsyncadd [#allocation3], %s23
      %s25 = sshll.u32 [#allocation2], 4
      %s26 = int_to_ptr.vmem [resolvable:$true] %s25
      %31 = dma.hbm_to_vmem [thread:$0]  %s3, 1024, %s26, [#allocation3], 64, 64, 4
    $region17: #{tpu_custom_call.1} parent=1 // pred_fallthru
      _
    // Predicated region
    $region18: #{tpu_custom_call.1} parent=1 // pred_check
      _
    $region19: #{tpu_custom_call.1} parent=1 // pred_check_branch
      %33 = sbr.rel (0) target = $region21
    $region20: #{tpu_custom_call.1} parent=1 // pred_region
      _
    $region21: #{tpu_custom_call.1} parent=1 // pred_fallthru
      _
    // Predicated region
    $region22: #{tpu_custom_call.1} parent=1 // pred_check
      _
    $region23: #{tpu_custom_call.1} parent=1 // pred_check_branch
      %35 = sbr.rel (0) target = $region25
    $region24: #{tpu_custom_call.1} parent=1 // pred_region
      %s37 = ssub.s32 32, 32
      %38 = vsyncadd [#allocation6], %s37
      %s40 = sshll.u32 [#allocation5], 4
      %s41 = int_to_ptr.vmem [resolvable:$true] %s40
      %43 = dma.hbm_to_vmem [thread:$0]  %s5, 32, %s41, [#allocation6]
    $region25: #{tpu_custom_call.1} parent=1 // pred_fallthru
      _
    // Predicated region
    $region26: #{tpu_custom_call.1} parent=1 // pred_check
      _
    $region27: #{tpu_custom_call.1} parent=1 // pred_check_branch
      %45 = sbr.rel (0) target = $region29
    $region28: #{tpu_custom_call.1} parent=1 // pred_region
      %46 = dma.done [#allocation3], 1024
    $region29: #{tpu_custom_call.1} parent=1 // pred_fallthru
      _
    // Predicated region
    $region30: #{tpu_custom_call.1} parent=1 // pred_check
      _
    $region31: #{tpu_custom_call.1} parent=1 // pred_check_branch
      %48 = sbr.rel (0) target = $region33
    $region32: #{tpu_custom_call.1} parent=1 // pred_region
      %49 = dma.done [#allocation6], 32
    $region33: #{tpu_custom_call.1} parent=1 // pred_fallthru
      _
    %v51 = vlaneseq
    %v52 = vand.u32 %v51, 127
    %vm53 = vcmp.lt.s32.totalorder %v52, 16
    %v54 = vsub.s32 %v52, 16
    %v55 = vsel %vm53, %v52, %v54
    %v56 = vcvt.s32.f32 %v55
    %v57 = vmul.f32 %v56, -0.5756463
    %v58 = vmul.f32 %v57, 1.442695
    %v59 = vpow.pop %v58
    %v60 = vld [vmem:[%s0] sm:$0x3]
    %62 = vset.pattern.permute.xlu0 0
    %63 = vperm.xlu0 %62, %v60
    %v64 = vpop.permute.xlu0 %63
    %v66 = vmul.f32 %v64, %v59
    %v67 = vand.u32 2147483647, %v66
    %vm68 = vcmp.le.f32.partialorder %v67, 0.7853982
    %vm69 = vcmp.lt.s32.totalorder %v66, 0
    %v70 = vand.u32 %v66, 2139095040
    %v71 = vshrl.u32 %v70, 23
    %v72 = vsub.s32 %v71, 127
    %v73 = vand.u32 2147483647, %v66
    %v74 = vand.u32 %v73, 8388607
    %v75 = vor.u32 %v74, 8388608
    %v76 = vsub.s32 0, %v75
    %v77 = vadd.s32 %v72, 1
    %vm78 = vcmp.gt.s32.totalorder %v77, 0
    %v79 = vsel %vm78, %v77, 0
    %v80 = vshrl.u32 %v79, 5
    %v81 = vand.u32 %v79, 31
    %v82 = vsub.s32 32, %v81
    %v83 = vshrl.u32 683565275, %v82
    %v84 = vshll.u32 683565275, %v81
    %v85 = vshrl.u32 2475754826, %v82
    %v86 = vor.u32 %v84, %v85
    %v87 = vshll.u32 2475754826, %v81
    %v88 = vshrl.u32 2131351028, %v82
    %v89 = vor.u32 %v87, %v88
    %v90 = vshll.u32 2131351028, %v81
    %v91 = vshrl.u32 2102212464, %v82
    %v92 = vor.u32 %v90, %v91
    %v93 = vshll.u32 2102212464, %v81
    %v94 = vshrl.u32 920167782, %v82
    %v95 = vor.u32 %v93, %v94
    %v96 = vshll.u32 920167782, %v81
    %v97 = vshrl.u32 1326507024, %v82
    %v98 = vor.u32 %v96, %v97
    %vm99 = vcmp.lt.s32.totalorder %v80, 1
    %vm100 = vcmp.lt.s32.totalorder %v80, 2
    %vm101 = vcmp.lt.s32.totalorder %v80, 3
    %vm102 = vcmp.lt.s32.totalorder %v80, 4
    %v103 = vsel %vm99, %v83, %v86
    %v104 = vsel %vm102, %v92, 2102212464
    %v105 = vsel %vm101, %v89, %v104
    %v106 = vsel %vm100, %v103, %v105
    %v107 = vsel %vm99, %v86, %v89
    %v108 = vsel %vm102, %v95, 920167782
    %v109 = vsel %vm101, %v92, %v108
    %v110 = vsel %vm100, %v107, %v109
    %v111 = vsel %vm99, %v89, %v92
    %v112 = vsel %vm102, %v98, 1326507024
    %v113 = vsel %vm101, %v95, %v112
    %v114 = vsel %vm100, %v111, %v113
    %v115 = vshll.u32 %v75, 8
    %v116 = vmul.u32.u64.compose %v115, %v114
    %v117 = vextract.low.u32 %v116
    %v118 = vextract.high.u32 %v116
    %v119 = vmul.u32.u64.compose %v115, %v110
    %v120 = vextract.low.u32 %v119
    %v121 = vextract.high.u32 %v119
    %v122 = vmul.u32 %v115, %v106
    %v123 = vadd.s32 %v118, %v120
    %vm124 = vc.u32 %v118, %v120
    %v125 = vadd.s32 %v121, 1
    %v126 = vsel %vm124, %v125, %v121
    %v127 = vadd.s32 %v122, %v126
    %v128 = vadd.s32 %v127, 536870912
    %v129 = vshrl.u32 %v128, 30
    %v130 = vshll.u32 %v129, 30
    %v131 = vsub.s32 %v127, %v130
    %vm132 = vcmp.lt.s32.totalorder %v131, 0
    %v133 = vsub.s32 0, %v131
    %v134 = vsel %vm132, %v133, %v131
    %v135 = vclz %v134
    %v136 = vsub.s32 %v135, 2
    %vm137 = vcmp.gt.s32.totalorder 0, %v136
    %v138 = vsel %vm137, 0, %v136
    %v139 = vsub.s32 32, %v138
    %v140 = vshll.u32 %v131, %v138
    %v141 = vshrl.u32 %v123, %v139
    %v142 = vor.u32 %v140, %v141
    %v143 = vsub.s32 4294967266, %v138
    %v144 = vadd.s32 %v143, 127
    %v145 = vshll.u32 %v144, 23
    %v146 = vor.u32 4788187, %v145
    %v147 = vand.u32 2147483647, %v146
    %v149 = vcvt.s32.f32 %v142
    %v150 = vmul.f32 %v149, %v147
    %v151 = vxor.u32 %v150, 2147483648
    %v152 = vsel %vm69, %v151, %v150
    %v153 = vsub.s32 4, %v129
    %v154 = vsel %vm69, %v153, %v129
    %v155 = vsel %vm68, %v66, %v152
    %v156 = vsel %vm68, 0, %v154
    %v157 = vcosq.f32.pop %v155
    %v158 = vsinq.f32.pop %v155
    %vm159 = vweird.f32 %v66
    %v160 = vand.u32 %v156, 3
    %vm161 = vcmp.lt.s32.totalorder %v160, 2
    %vm162 = vcmp.eq.s32.totalorder %v160, 0
    %v163 = vxor.u32 %v158, 2147483648
    %v164 = vsel %vm162, %v157, %v163
    %vm165 = vcmp.eq.s32.totalorder %v160, 2
    %v166 = vxor.u32 %v157, 2147483648
    %v167 = vsel %vm165, %v166, %v158
    %v168 = vsel %vm161, %v164, %v167
    %v169 = vsel %vm159, nan, %v168
    %v170 = vand.u32 2147483647, %v66
    %vm171 = vcmp.le.f32.partialorder %v170, 0.7853982
    %vm172 = vcmp.lt.s32.totalorder %v66, 0
    %v173 = vand.u32 %v66, 2139095040
    %v174 = vshrl.u32 %v173, 23
    %v175 = vsub.s32 %v174, 127
    %v176 = vand.u32 2147483647, %v66
    %v177 = vand.u32 %v176, 8388607
    %v178 = vor.u32 %v177, 8388608
    %v179 = vsub.s32 0, %v178
    %v180 = vadd.s32 %v175, 1
    %vm181 = vcmp.gt.s32.totalorder %v180, 0
    %v182 = vsel %vm181, %v180, 0
    %v183 = vshrl.u32 %v182, 5
    %v184 = vand.u32 %v182, 31
    %v185 = vsub.s32 32, %v184
    %v186 = vshrl.u32 683565275, %v185
    %v187 = vshll.u32 683565275, %v184
    %v188 = vshrl.u32 2475754826, %v185
    %v189 = vor.u32 %v187, %v188
    %v190 = vshll.u32 2475754826, %v184
    %v191 = vshrl.u32 2131351028, %v185
    %v192 = vor.u32 %v190, %v191
    %v193 = vshll.u32 2131351028, %v184
    %v194 = vshrl.u32 2102212464, %v185
    %v195 = vor.u32 %v193, %v194
    %v196 = vshll.u32 2102212464, %v184
    %v197 = vshrl.u32 920167782, %v185
    %v198 = vor.u32 %v196, %v197
    %v199 = vshll.u32 920167782, %v184
    %v200 = vshrl.u32 1326507024, %v185
    %v201 = vor.u32 %v199, %v200
    %vm202 = vcmp.lt.s32.totalorder %v183, 1
    %vm203 = vcmp.lt.s32.totalorder %v183, 2
    %vm204 = vcmp.lt.s32.totalorder %v183, 3
    %vm205 = vcmp.lt.s32.totalorder %v183, 4
    %v206 = vsel %vm202, %v186, %v189
    %v207 = vsel %vm205, %v195, 2102212464
    %v208 = vsel %vm204, %v192, %v207
    %v209 = vsel %vm203, %v206, %v208
    %v210 = vsel %vm202, %v189, %v192
    %v211 = vsel %vm205, %v198, 920167782
    %v212 = vsel %vm204, %v195, %v211
    %v213 = vsel %vm203, %v210, %v212
    %v214 = vsel %vm202, %v192, %v195
    %v215 = vsel %vm205, %v201, 1326507024
    %v216 = vsel %vm204, %v198, %v215
    %v217 = vsel %vm203, %v214, %v216
    %v218 = vshll.u32 %v178, 8
    %v219 = vmul.u32.u64.compose %v218, %v217
    %v220 = vextract.low.u32 %v219
    %v221 = vextract.high.u32 %v219
    %v222 = vmul.u32.u64.compose %v218, %v213
    %v223 = vextract.low.u32 %v222
    %v224 = vextract.high.u32 %v222
    %v225 = vmul.u32 %v218, %v209
    %v226 = vadd.s32 %v221, %v223
    %vm227 = vc.u32 %v221, %v223
    %v228 = vadd.s32 %v224, 1
    %v229 = vsel %vm227, %v228, %v224
    %v230 = vadd.s32 %v225, %v229
    %v231 = vadd.s32 %v230, 536870912
    %v232 = vshrl.u32 %v231, 30
    %v233 = vshll.u32 %v232, 30
    %v234 = vsub.s32 %v230, %v233
    %vm235 = vcmp.lt.s32.totalorder %v234, 0
    %v236 = vsub.s32 0, %v234
    %v237 = vsel %vm235, %v236, %v234
    %v238 = vclz %v237
    %v239 = vsub.s32 %v238, 2
    %vm240 = vcmp.gt.s32.totalorder 0, %v239
    %v241 = vsel %vm240, 0, %v239
    %v242 = vsub.s32 32, %v241
    %v243 = vshll.u32 %v234, %v241
    %v244 = vshrl.u32 %v226, %v242
    %v245 = vor.u32 %v243, %v244
    %v246 = vsub.s32 4294967266, %v241
    %v247 = vadd.s32 %v246, 127
    %v248 = vshll.u32 %v247, 23
    %v249 = vor.u32 4788187, %v248
    %v250 = vand.u32 2147483647, %v249
    %v252 = vcvt.s32.f32 %v245
    %v253 = vmul.f32 %v252, %v250
    %v254 = vxor.u32 %v253, 2147483648
    %v255 = vsel %vm172, %v254, %v253
    %v256 = vsub.s32 4, %v232
    %v257 = vsel %vm172, %v256, %v232
    %v258 = vsel %vm171, %v66, %v255
    %v259 = vsel %vm171, 0, %v257
    %v260 = vcosq.f32.pop %v258
    %v261 = vsinq.f32.pop %v258
    %vm262 = vweird.f32 %v66
    %v263 = vadd.s32 %v259, 3
    %v264 = vand.u32 %v263, 3
    %vm265 = vcmp.lt.s32.totalorder %v264, 2
    %vm266 = vcmp.eq.s32.totalorder %v264, 0
    %v267 = vxor.u32 %v261, 2147483648
    %v268 = vsel %vm266, %v260, %v267
    %vm269 = vcmp.eq.s32.totalorder %v264, 2
    %v270 = vxor.u32 %v260, 2147483648
    %v271 = vsel %vm269, %v270, %v261
    %v272 = vsel %vm265, %v268, %v271
    %v273 = vsel %vm262, nan, %v272
    %v274 = vsel %vm53, %v169, %v273
    %v275 = vpack.c.bf16 %v274, %v274
    %v276 = vld [vmem:[%s1] sm:$0xf]
    %v277 = vld [vmem:[%s1 + $0x4] sm:$0xf]
    %v278 = vld [vmem:[%s1 + $0x8] sm:$0xf]
    %v279 = vld [vmem:[%s1 + $0xc] sm:$0xf]
    %v280 = vld [vmem:[%s2] sm:$0x1]
    %v282 = vlaneseq
    %v283 = vshrl.u32 %v282, 7
    %v284 = vsub.s32 0, %v283
    %v285 = vrot.slane %v280, %v284
    %v291 = vunpack.c.l.b16 %v276
    %v292 = vunpack.c.l.b16 %v277
    %v293 = vunpack.c.l.b16 %v278
    %v294 = vunpack.c.l.b16 %v279
    %v295 = vpack.c.b16 %v292, %v291
    %v296 = vpack.c.b16 %v294, %v293
    %vm299 = vcmask 261120
    %v301 = vsel %vm299, %v275, 0
    %303 = vmatprep.subr.bf16.mxu0 0
    %304 = vmatpush1.bf16.msra.mxu0 %v295
    %305 = vmatprep.subr.bf16.mxu0 0
    %306 = vmatpush1.bf16.msra.mxu0 %v296
    %307 = vmatprep.subr.bf16.mxu0 0
    %308 = vmatpush1.bf16.msra.mxu0 0
    %309 = vmatprep.subr.bf16.mxu0 0
    %310 = vmatpush1.bf16.msra.mxu0 0
    %311 = vmatprep.subr.bf16.mxu0 0
    %312 = vmatpush1.bf16.msra.mxu0 0
    %313 = vmatprep.subr.bf16.mxu0 0
    %314 = vmatpush1.bf16.msra.mxu0 0
    %315 = vmatprep.subr.bf16.mxu0 0
    %316 = vmatpush1.bf16.msra.mxu0 0
    %317 = vmatprep.subr.bf16.mxu0 0
    %318 = vmatpush1.bf16.msra.mxu0 0
    %319 = vmatprep.subr.bf16.mxu0 0
    %320 = vmatpush1.bf16.msra.mxu0 0
    %321 = vmatprep.subr.bf16.mxu0 0
    %322 = vmatpush1.bf16.msra.mxu0 0
    %323 = vmatprep.subr.bf16.mxu0 0
    %324 = vmatpush1.bf16.msra.mxu0 0
    %325 = vmatprep.subr.bf16.mxu0 0
    %326 = vmatpush1.bf16.msra.mxu0 0
    %327 = vmatprep.subr.bf16.mxu0 0
    %328 = vmatpush1.bf16.msra.mxu0 0
    %329 = vmatprep.subr.bf16.mxu0 0
    %330 = vmatpush1.bf16.msra.mxu0 0
    %331 = vmatprep.subr.bf16.mxu0 0
    %332 = vmatpush1.bf16.msra.mxu0 0
    %333 = vmatprep.subr.bf16.mxu0 0
    %334 = vmatpush1.bf16.msra.mxu0 0
    %335 = vmatprep.mubr.bf16.mxu0 0
    %336 = vmatmul.mubr.bf16.gmra.mrb[0].mxu0 %v301
    %v337 = vpop.f32.mrb[0].mxu0
    %v338 = vadd.f32 %v285, %v337
    %v339 = vpop.f32.mrb[0].mxu0
    %v340 = vpop.f32.mrb[0].mxu0
    %v341 = vpop.f32.mrb[0].mxu0
    %342 = vdwg.mxu0
    %v343 = vxor.u32 %v338, 2147483648
    %v344 = vmul.f32 %v343, 1.442695
    %v345 = vpow.pop %v344
    %v346 = vadd.f32 %v345, 1.0
    %v347 = vrcp.pop %v346
    %v348 = vmul.f32 1.0, %v347
    %v349 = vmul.f32 %v338, %v348
    %v350 = vpack.c.bf16 %v349, %v349
    %v351 = vld [vmem:[#allocation2] sm:$0xf]
    %v352 = vld [vmem:[#allocation2 + $0x4] sm:$0xf]
    %v353 = vld [vmem:[#allocation2 + $0x8] sm:$0xf]
    %v354 = vld [vmem:[#allocation2 + $0xc] sm:$0xf]
    %v355 = vld [vmem:[#allocation2 + $0x10] sm:$0xf]
    %v356 = vld [vmem:[#allocation2 + $0x14] sm:$0xf]
    %v357 = vld [vmem:[#allocation2 + $0x18] sm:$0xf]
    %v358 = vld [vmem:[#allocation2 + $0x1c] sm:$0xf]
    %v359 = vld [vmem:[#allocation2 + $0x20] sm:$0xf]
    %v360 = vld [vmem:[#allocation2 + $0x24] sm:$0xf]
    %v361 = vld [vmem:[#allocation2 + $0x28] sm:$0xf]
    %v362 = vld [vmem:[#allocation2 + $0x2c] sm:$0xf]
    %v363 = vld [vmem:[#allocation2 + $0x30] sm:$0xf]
    %v364 = vld [vmem:[#allocation2 + $0x34] sm:$0xf]
    %v365 = vld [vmem:[#allocation2 + $0x38] sm:$0xf]
    %v366 = vld [vmem:[#allocation2 + $0x3c] sm:$0xf]
    %v367 = vld [vmem:[%s4] sm:$0x1]
    %v369 = vlaneseq
    %v370 = vshrl.u32 %v369, 7
    %v371 = vsub.s32 0, %v370
    %v372 = vrot.slane %v367, %v371
    %v390 = vunpack.c.l.b16 %v351
    %v391 = vunpack.c.l.b16 %v352
    %v392 = vunpack.c.l.b16 %v353
    %v393 = vunpack.c.l.b16 %v354
    %v394 = vunpack.c.l.b16 %v355
    %v395 = vunpack.c.l.b16 %v356
    %v396 = vunpack.c.l.b16 %v357
    %v397 = vunpack.c.l.b16 %v358
    %v398 = vunpack.c.l.b16 %v359
    %v399 = vunpack.c.l.b16 %v360
    %v400 = vunpack.c.l.b16 %v361
    %v401 = vunpack.c.l.b16 %v362
    %v402 = vunpack.c.l.b16 %v363
    %v403 = vunpack.c.l.b16 %v364
    %v404 = vunpack.c.l.b16 %v365
    %v405 = vunpack.c.l.b16 %v366
    %v406 = vpack.c.b16 %v391, %v390
    %v407 = vpack.c.b16 %v393, %v392
    %v408 = vpack.c.b16 %v395, %v394
    %v409 = vpack.c.b16 %v397, %v396
    %v410 = vpack.c.b16 %v399, %v398
    %v411 = vpack.c.b16 %v401, %v400
    %v412 = vpack.c.b16 %v403, %v402
    %v413 = vpack.c.b16 %v405, %v404
    %422 = vmatprep.subr.bf16.mxu0 0
    %423 = vmatpush1.bf16.msra.mxu0 %v406
    %424 = vmatprep.subr.bf16.mxu0 0
    %425 = vmatpush1.bf16.msra.mxu0 %v407
    %426 = vmatprep.subr.bf16.mxu0 0
    %427 = vmatpush1.bf16.msra.mxu0 %v408
    %428 = vmatprep.subr.bf16.mxu0 0
    %429 = vmatpush1.bf16.msra.mxu0 %v409
    %430 = vmatprep.subr.bf16.mxu0 0
    %431 = vmatpush1.bf16.msra.mxu0 %v410
    %432 = vmatprep.subr.bf16.mxu0 0
    %433 = vmatpush1.bf16.msra.mxu0 %v411
    %434 = vmatprep.subr.bf16.mxu0 0
    %435 = vmatpush1.bf16.msra.mxu0 %v412
    %436 = vmatprep.subr.bf16.mxu0 0
    %437 = vmatpush1.bf16.msra.mxu0 %v413
    %438 = vmatprep.subr.bf16.mxu0 0
    %439 = vmatpush1.bf16.msra.mxu0 0
    %440 = vmatprep.subr.bf16.mxu0 0
    %441 = vmatpush1.bf16.msra.mxu0 0
    %442 = vmatprep.subr.bf16.mxu0 0
    %443 = vmatpush1.bf16.msra.mxu0 0
    %444 = vmatprep.subr.bf16.mxu0 0
    %445 = vmatpush1.bf16.msra.mxu0 0
    %446 = vmatprep.subr.bf16.mxu0 0
    %447 = vmatpush1.bf16.msra.mxu0 0
    %448 = vmatprep.subr.bf16.mxu0 0
    %449 = vmatpush1.bf16.msra.mxu0 0
    %450 = vmatprep.subr.bf16.mxu0 0
    %451 = vmatpush1.bf16.msra.mxu0 0
    %452 = vmatprep.subr.bf16.mxu0 0
    %453 = vmatpush1.bf16.msra.mxu0 0
    %454 = vmatprep.mubr.bf16.mxu0 0
    %455 = vmatmul.mubr.bf16.gmra.mrb[0].mxu0 %v350
    %v456 = vpop.f32.mrb[0].mxu0
    %v457 = vadd.f32 %v372, %v456
    %v458 = vpop.f32.mrb[0].mxu0
    %v459 = vpop.f32.mrb[0].mxu0
    %v460 = vpop.f32.mrb[0].mxu0
    %461 = vdwg.mxu0
    %v462 = vld [vmem:[#allocation5] sm:$0x3]
    %v463 = vadd.f32 %v462, %v457
    %464 = vst [vmem:[#allocation7] sm:$0x3] %v463
    // Predicated region
    $region34: #{tpu_custom_call.1} parent=1 // pred_check
      _
    $region35: #{tpu_custom_call.1} parent=1 // pred_check_branch
      %466 = sbr.rel (0) target = $region37
    $region36: #{tpu_custom_call.1} parent=1 // pred_region
      %s468 = ssub.s32 32, 32
      %469 = vsyncadd [#allocation4], %s468
      %s471 = sshll.u32 [#allocation7], 4
      %s472 = int_to_ptr.vmem [resolvable:$true] %s471
      %474 = dma.vmem_to_hbm [thread:$0]  %s472, 32, %s6, [#allocation4]
    $region37: #{tpu_custom_call.1} parent=1 // pred_fallthru
      _
    // Predicated region
    $region38: #{tpu_custom_call.1} parent=1 // pred_check
      _
    $region39: #{tpu_custom_call.1} parent=1 // pred_check_branch
      %476 = sbr.rel (0) target = $region41
    $region40: #{tpu_custom_call.1} parent=1 // pred_region
      %477 = dma.done [#allocation4], 32
    $region41: #{tpu_custom_call.1} parent=1 // pred_fallthru
      _
    %478 = vsyncpa [#allocation3], 1
    %479 = vsyncpa [#allocation6], 1
    %480 = vsyncpa [#allocation4], 1

</llo_original>
